<compile_context>
chip_gen: v7x
topology: tpu7x:2x2x1
jax: 0.10.0
libtpu: 0.0.40
codegen_flags: <defaults>
</compile_context>

<pallas_src>
import functools

import jax
import jax.numpy as jnp
from jax.experimental import pallas as pl
from jax.experimental.pallas import tpu as pltpu

INPUT_SIZE = 40
HIDDEN = 50
NUM_CLASSES = 11

HID_PAD = 128   # hidden 50 -> 128: clean 128-lane MXU tiles; weights tiny & resident
OUT_PAD = 16    # output 11 -> 16: narrow f32 output slab (8x less writeback vs 128)


def _cdiv(a, b):
    return (a + b - 1) // b


def _round_up(x, m):
    return (x + m - 1) // m * m


def mlp_kernel(x_ref, w1_ref, b1_ref, w2_ref, b2_ref, o_ref):
    # x_ref : (TB, 40)        streamed batch tile (native dtype; cast in-regs)
    # w1_ref: (40, HID_PAD)   resident across the whole grid (bf16 by default)
    # b1_ref: (1, HID_PAD)    resident, always f32
    # w2_ref: (HID_PAD, 16)   resident
    # b2_ref: (1, 16)         resident, always f32
    # o_ref : (TB, 16)        f32 narrow output slab
    xv = x_ref[...].astype(w1_ref.dtype)
    h = jnp.dot(xv, w1_ref[...], preferred_element_type=jnp.float32)
    h = jnp.maximum(h + b1_ref[...], 0.0)            # f32 elementwise (v5e-safe)
    out = jnp.dot(h.astype(w2_ref.dtype), w2_ref[...],
                  preferred_element_type=jnp.float32)
    o_ref[...] = (out + b2_ref[...]).astype(o_ref.dtype)


def prepare_params(w1, b1, w2, b2, param_dtype=jnp.bfloat16):
    """Pad/cast the tiny weights & biases ONCE (call at init, not per forward).

    w1: (40, 50), b1: (50,)|(1,50), w2: (50, 11), b2: (11,)|(1,11).
    Zero padding of the extra hidden/output columns is mathematically inert.
    """
    pd = jnp.dtype(param_dtype)
    w1p = jnp.zeros((INPUT_SIZE, HID_PAD), pd).at[:, :HIDDEN].set(w1.astype(pd))
    b1p = jnp.zeros((1, HID_PAD), jnp.float32).at[:, :HIDDEN].set(
        jnp.reshape(b1, (1, HIDDEN)).astype(jnp.float32))
    w2p = jnp.zeros((HID_PAD, OUT_PAD), pd).at[:HIDDEN, :NUM_CLASSES].set(w2.astype(pd))
    b2p = jnp.zeros((1, OUT_PAD), jnp.float32).at[:, :NUM_CLASSES].set(
        jnp.reshape(b2, (1, NUM_CLASSES)).astype(jnp.float32))
    return w1p, b1p, w2p, b2p


@functools.partial(jax.jit, static_argnames=("max_tile_b",))
def mlp_forward(x, w1p, b1p, w2p, b2p, *, max_tile_b=2048):
    """x: (B, 40). Returns (B, 11) f32 == relu(x @ w1 + b1) @ w2 + b2."""
    B = x.shape[0]
    # >= 4 grid steps when possible so ("parallel",) shards across both v7x
    # TensorCores; large (multiple-of-8) tiles amortize per-step overhead.
    tile_b = min(max_tile_b, max(8, _round_up(_cdiv(B, 4), 8)))
    grid = (_cdiv(B, tile_b),)

    cost = pl.CostEstimate(
        flops=2 * B * (INPUT_SIZE * HID_PAD + HID_PAD * OUT_PAD),
        transcendentals=0,
        bytes_accessed=(B * INPUT_SIZE * x.dtype.itemsize          # x stream in
                        + B * OUT_PAD * 4                          # narrow f32 out
                        + (INPUT_SIZE * HID_PAD
                           + HID_PAD * OUT_PAD) * w1p.dtype.itemsize
                        + (HID_PAD + OUT_PAD) * 4),                # biases once
    )

    out = pl.pallas_call(
        mlp_kernel,
        out_shape=jax.ShapeDtypeStruct((B, OUT_PAD), jnp.float32),
        grid=grid,
        in_specs=[
            # x streamed per batch tile; last dim 40 == full array dim (legal).
            pl.BlockSpec((tile_b, INPUT_SIZE), lambda i: (i, 0)),
            pl.BlockSpec((INPUT_SIZE, HID_PAD), lambda i: (0, 0)),   # w1 resident
            pl.BlockSpec((1, HID_PAD), lambda i: (0, 0)),            # b1 resident
            pl.BlockSpec((HID_PAD, OUT_PAD), lambda i: (0, 0)),      # w2 resident
            pl.BlockSpec((1, OUT_PAD), lambda i: (0, 0)),            # b2 resident
        ],
        out_specs=pl.BlockSpec((tile_b, OUT_PAD), lambda i: (i, 0)),
        compiler_params=pltpu.CompilerParams(
            dimension_semantics=("parallel",)),
        cost_estimate=cost,
    )(x, w1p, b1p, w2p, b2p)

    # Drop only the 5 padded output columns (rows were never padded).
    return out[:, :NUM_CLASSES]


def init_params(key):
    # Deterministic synthetic init mirroring torch.nn.Linear's shapes.
    # torch stores weight as (out, in); we keep (in, out) for x @ W.
    k1, k2, k3, k4 = jax.random.split(key, 4)
    bound1 = 1.0 / jnp.sqrt(INPUT_SIZE)
    bound2 = 1.0 / jnp.sqrt(HIDDEN)
    w1 = jax.random.uniform(k1, (INPUT_SIZE, HIDDEN), jnp.float32, -bound1, bound1)
    b1 = jax.random.uniform(k2, (1, HIDDEN), jnp.float32, -bound1, bound1)
    w2 = jax.random.uniform(k3, (HIDDEN, NUM_CLASSES), jnp.float32, -bound2, bound2)
    b2 = jax.random.uniform(k4, (1, NUM_CLASSES), jnp.float32, -bound2, bound2)
    return w1, b1, w2, b2


def _reference(x, w1, b1, w2, b2):
    return jnp.maximum(x @ w1 + jnp.reshape(b1, (1, HIDDEN)), 0.0) @ w2 \
        + jnp.reshape(b2, (1, NUM_CLASSES))


if __name__ == "__main__":
    key = jax.random.PRNGKey(0)
    kx, kp, kx2, kx3 = jax.random.split(key, 4)

    w1, b1, w2, b2 = init_params(kp)

    # Params prepared once: f32 path (tight check) and bf16 path (default).
    params_f32 = prepare_params(w1, b1, w2, b2, param_dtype=jnp.float32)
    params_bf16 = prepare_params(w1, b1, w2, b2, param_dtype=jnp.bfloat16)

    # --- small batch, single grid step, f32 params (tight tolerance) ---
    x = jax.random.normal(kx, (8, INPUT_SIZE), jnp.float32)
    out = jax.block_until_ready(mlp_forward(x, *params_f32))
    ref = _reference(x, w1, b1, w2, b2)
    assert out.shape == (8, NUM_CLASSES)
    assert jnp.allclose(out, ref, atol=2e-5, rtol=2e-5)

    # --- multi-step grid with an overhanging (non-divisible) batch tail, f32 ---
    x2 = jax.random.normal(kx2, (300, INPUT_SIZE), jnp.float32)
    out2 = jax.block_until_ready(mlp_forward(x2, *params_f32))
    ref2 = _reference(x2, w1, b1, w2, b2)
    assert out2.shape == (300, NUM_CLASSES)
    assert jnp.allclose(out2, ref2, atol=1e-4, rtol=1e-4)

    # --- default bf16 streaming params (v5e/v6e/v7x bandwidth path) ---
    out2_bf16 = jax.block_until_ready(mlp_forward(x2, *params_bf16))
    assert out2_bf16.shape == (300, NUM_CLASSES)
    assert jnp.allclose(out2_bf16, ref2, atol=5e-2, rtol=5e-2)

    # --- larger divisible batch, 4 parallel grid steps, bf16 params ---
    x3 = jax.random.normal(kx3, (2048, INPUT_SIZE), jnp.float32)
    out3 = jax.block_until_ready(mlp_forward(x3, *params_bf16))
    ref3 = _reference(x3, w1, b1, w2, b2)
    assert out3.shape == (2048, NUM_CLASSES)
    assert jnp.allclose(out3, ref3, atol=5e-2, rtol=5e-2)

    print("KERNEL_OK")
</pallas_src>

<mosaic_0001>
module attributes {stable_mosaic.version = 11 : i64} {
  func.func @mlp_kernel(%arg0: i32, %arg1: memref<8x40xf32, #tpu.memory_space<vmem>>, %arg2: memref<40x128xf32, #tpu.memory_space<vmem>>, %arg3: memref<1x128xf32, #tpu.memory_space<vmem>>, %arg4: memref<128x16xf32, #tpu.memory_space<vmem>>, %arg5: memref<1x16xf32, #tpu.memory_space<vmem>>, %arg6: memref<8x16xf32, #tpu.memory_space<vmem>>) attributes {dimension_semantics = [#tpu.dimension_semantics<parallel>], iteration_bounds = array<i64: 1>, scalar_prefetch = 0 : i64, scratch_operands = 0 : i64, tpu.core_type = #tpu.core_type<tc>, window_params = [{transform_indices = @transform_0, window_bounds = array<i64: 8, 40>}, {pipeline_mode = #tpu.pipeline_mode<synchronous>, transform_indices = @transform_1, window_bounds = array<i64: 40, 128>}, {pipeline_mode = #tpu.pipeline_mode<synchronous>, transform_indices = @transform_2, window_bounds = array<i64: 1, 128>}, {pipeline_mode = #tpu.pipeline_mode<synchronous>, transform_indices = @transform_3, window_bounds = array<i64: 128, 16>}, {pipeline_mode = #tpu.pipeline_mode<synchronous>, transform_indices = @transform_4, window_bounds = array<i64: 1, 16>}, {transform_indices = @transform_5, window_bounds = array<i64: 8, 16>}]} {
    %c0 = arith.constant 0 : index
    %c0_0 = arith.constant 0 : index
    %0 = vector.load %arg1[%c0, %c0_0] : memref<8x40xf32, #tpu.memory_space<vmem>>, vector<8x40xf32>
    %c0_1 = arith.constant 0 : index
    %c0_2 = arith.constant 0 : index
    %1 = vector.load %arg2[%c0_1, %c0_2] : memref<40x128xf32, #tpu.memory_space<vmem>>, vector<40x128xf32>
    %cst = arith.constant dense<0.000000e+00> : vector<8x128xf32>
    %2 = tpu.matmul %0, %1, %cst {dimension_numbers = #tpu.dot_dimension_numbers<[1], [0], [0], [1], [0, 0, 1, 1], [], []>} : vector<8x40xf32>, vector<40x128xf32>, vector<8x128xf32> -> vector<8x128xf32>
    %c0_3 = arith.constant 0 : index
    %c0_4 = arith.constant 0 : index
    %3 = vector.load %arg3[%c0_3, %c0_4] : memref<1x128xf32, #tpu.memory_space<vmem>>, vector<1x128xf32>
    %4 = vector.broadcast %3 : vector<1x128xf32> to vector<8x128xf32>
    %5 = arith.addf %2, %4 : vector<8x128xf32>
    %cst_5 = arith.constant 0.000000e+00 : f32
    %6 = vector.broadcast %cst_5 : f32 to vector<8x128xf32>
    %7 = arith.maximumf %5, %6 : vector<8x128xf32>
    %c0_6 = arith.constant 0 : index
    %c0_7 = arith.constant 0 : index
    %8 = vector.load %arg4[%c0_6, %c0_7] : memref<128x16xf32, #tpu.memory_space<vmem>>, vector<128x16xf32>
    %cst_8 = arith.constant dense<0.000000e+00> : vector<8x16xf32>
    %9 = tpu.matmul %7, %8, %cst_8 {dimension_numbers = #tpu.dot_dimension_numbers<[1], [0], [0], [1], [0, 0, 1, 1], [], []>} : vector<8x128xf32>, vector<128x16xf32>, vector<8x16xf32> -> vector<8x16xf32>
    %c0_9 = arith.constant 0 : index
    %c0_10 = arith.constant 0 : index
    %10 = vector.load %arg5[%c0_9, %c0_10] : memref<1x16xf32, #tpu.memory_space<vmem>>, vector<1x16xf32>
    %11 = vector.broadcast %10 : vector<1x16xf32> to vector<8x16xf32>
    %12 = arith.addf %9, %11 : vector<8x16xf32>
    %c0_11 = arith.constant 0 : index
    %c0_12 = arith.constant 0 : index
    %13 = vector.load %arg6[%c0_11, %c0_12] : memref<8x16xf32, #tpu.memory_space<vmem>>, vector<8x16xf32>
    tpu.vector_store %arg6[%c0_11, %c0_12], %12 {strides = array<i32>} : memref<8x16xf32, #tpu.memory_space<vmem>>, vector<8x16xf32>,
    return
  }
  func.func @transform_0(%arg0: i32) -> (i32, i32) {
    %c0_i32 = arith.constant 0 : i32
    %c0_i32_0 = arith.constant 0 : i32
    return %arg0, %c0_i32 : i32, i32
  }
  func.func @transform_1(%arg0: i32) -> (i32, i32) {
    %c0_i32 = arith.constant 0 : i32
    %c0_i32_0 = arith.constant 0 : i32
    %c0_i32_1 = arith.constant 0 : i32
    return %c0_i32, %c0_i32_0 : i32, i32
  }
  func.func @transform_2(%arg0: i32) -> (i32, i32) {
    %c0_i32 = arith.constant 0 : i32
    %c0_i32_0 = arith.constant 0 : i32
    %c0_i32_1 = arith.constant 0 : i32
    return %c0_i32, %c0_i32_0 : i32, i32
  }
  func.func @transform_3(%arg0: i32) -> (i32, i32) {
    %c0_i32 = arith.constant 0 : i32
    %c0_i32_0 = arith.constant 0 : i32
    %c0_i32_1 = arith.constant 0 : i32
    return %c0_i32, %c0_i32_0 : i32, i32
  }
  func.func @transform_4(%arg0: i32) -> (i32, i32) {
    %c0_i32 = arith.constant 0 : i32
    %c0_i32_0 = arith.constant 0 : i32
    %c0_i32_1 = arith.constant 0 : i32
    return %c0_i32, %c0_i32_0 : i32, i32
  }
  func.func @transform_5(%arg0: i32) -> (i32, i32) {
    %c0_i32 = arith.constant 0 : i32
    %c0_i32_0 = arith.constant 0 : i32
    return %arg0, %c0_i32 : i32, i32
  }
}

</mosaic_0001>

<llo_original>
// kernel: mlp_forward.1
$region0: #{mlp_forward.1}
  #allocation0 [shape = 'u32[]', space=smem, size = 0x4, offset = 0x4, fixed_abs, tag = 'smem constant byte address 0x4 - core index']
  #allocation1 [shape = 'u32[144,128]{1,0:T(1,128)}', space=vmem, size = 0x12000, scoped, tag = 'internal scratch']
  %s0 = inlined_call_operand.vmem [shape: f32[8,40], index: 0, kind: input, shape index: {}]
  %s1 = inlined_call_operand.vmem [shape: f32[40,128], index: 1, kind: input, shape index: {}]
  %s2 = inlined_call_operand.vmem [shape: f32[1,128], index: 2, kind: input, shape index: {}]
  %s3 = inlined_call_operand.vmem [shape: f32[128,16], index: 3, kind: input, shape index: {}]
  %s4 = inlined_call_operand.vmem [shape: f32[1,16], index: 4, kind: input, shape index: {}]
  %s5 = inlined_call_operand.hbm [shape: f32[8,16], index: 5, kind: output, shape index: {}]
  %s6 = sld [smem:[#allocation0]]
  $region30: #{mlp_forward.1} parent=0
    _
  %s8 = ssub.s32 1, %s6
  %s9 = scalar_select 0, %s8, %s6
  $region1: #{mlp_forward.1} parent=0
    #allocation2 [shape = 'u8[4096]{0}', space=vmem, size = 0x1000, scoped, tag = 'output window, operand 0, single buffered']
    #allocation3 [shape = 's32[1]{0}', space=sflag, size = 0x4, scoped, tag = 'scoped memory for mlp_forward.1']
    %10 = vsyncpa [#allocation3], 0
    // Predicated region
    $region2: #{mlp_forward.1} parent=1 // pred_check
      _
    $region3: #{mlp_forward.1} parent=1 // pred_check_branch
      %12 = sbr.rel (0) target = $region5
    $region4: #{mlp_forward.1} parent=1 // pred_region
      _
    $region5: #{mlp_forward.1} parent=1 // pred_fallthru
      _
    // Predicated region
    $region6: #{mlp_forward.1} parent=1 // pred_check
      _
    $region7: #{mlp_forward.1} parent=1 // pred_check_branch
      %14 = sbr.rel (0) target = $region9
    $region8: #{mlp_forward.1} parent=1 // pred_region
      _
    $region9: #{mlp_forward.1} parent=1 // pred_fallthru
      _
    // Predicated region
    $region10: #{mlp_forward.1} parent=1 // pred_check
      _
    $region11: #{mlp_forward.1} parent=1 // pred_check_branch
      %16 = sbr.rel (0) target = $region13
    $region12: #{mlp_forward.1} parent=1 // pred_region
      _
    $region13: #{mlp_forward.1} parent=1 // pred_fallthru
      _
    // Predicated region
    $region14: #{mlp_forward.1} parent=1 // pred_check
      _
    $region15: #{mlp_forward.1} parent=1 // pred_check_branch
      %18 = sbr.rel (0) target = $region17
    $region16: #{mlp_forward.1} parent=1 // pred_region
      _
    $region17: #{mlp_forward.1} parent=1 // pred_fallthru
      _
    // Predicated region
    $region18: #{mlp_forward.1} parent=1 // pred_check
      _
    $region19: #{mlp_forward.1} parent=1 // pred_check_branch
      %20 = sbr.rel (0) target = $region21
    $region20: #{mlp_forward.1} parent=1 // pred_region
      _
    $region21: #{mlp_forward.1} parent=1 // pred_fallthru
      _
    %v21 = vld [vmem:[%s0] sm:$0xff]
    %v22 = vld [vmem:[%s1] sm:$0xff]
    %v23 = vld [vmem:[%s1 + $0x8] sm:$0xff]
    %v24 = vld [vmem:[%s1 + $0x10] sm:$0xff]
    %v25 = vld [vmem:[%s1 + $0x18] sm:$0xff]
    %v26 = vld [vmem:[%s1 + $0x20] sm:$0xff]
    %v27 = vld [vmem:[%s2] sm:$0x1]
    %v29 = vlaneseq
    %v30 = vshrl.u32 %v29, 7
    %v31 = vsub.s32 0, %v30
    %v32 = vrot.slane %v27, %v31
    %vm34 = vcmask 326656
    %v36 = vsel %vm34, %v21, 0
    %38 = vmatprep.subr.mxu0 0.0
    %39 = vmatpush1.msra.mxu0 %v22
    %40 = vmatprep.subr.mxu0 0.0
    %41 = vmatpush1.msra.mxu0 %v23
    %42 = vmatprep.subr.mxu0 0.0
    %43 = vmatpush1.msra.mxu0 %v24
    %44 = vmatprep.subr.mxu0 0.0
    %45 = vmatpush1.msra.mxu0 %v25
    %46 = vmatprep.subr.mxu0 0.0
    %47 = vmatpush1.msra.mxu0 %v26
    %48 = vmatprep.subr.mxu0 0.0
    %49 = vmatpush1.msra.mxu0 0.0
    %50 = vmatprep.subr.mxu0 0.0
    %51 = vmatpush1.msra.mxu0 0.0
    %52 = vmatprep.subr.mxu0 0.0
    %53 = vmatpush1.msra.mxu0 0.0
    %54 = vmatprep.subr.mxu0 0.0
    %55 = vmatpush1.msra.mxu0 0.0
    %56 = vmatprep.subr.mxu0 0.0
    %57 = vmatpush1.msra.mxu0 0.0
    %58 = vmatprep.subr.mxu0 0.0
    %59 = vmatpush1.msra.mxu0 0.0
    %60 = vmatprep.subr.mxu0 0.0
    %61 = vmatpush1.msra.mxu0 0.0
    %62 = vmatprep.subr.mxu0 0.0
    %63 = vmatpush1.msra.mxu0 0.0
    %64 = vmatprep.subr.mxu0 0.0
    %65 = vmatpush1.msra.mxu0 0.0
    %66 = vmatprep.subr.mxu0 0.0
    %67 = vmatpush1.msra.mxu0 0.0
    %68 = vmatprep.subr.mxu0 0.0
    %69 = vmatpush1.msra.mxu0 0.0
    %70 = vmatprep.subr.mxu0 0.0
    %71 = vmatpush1.msra.mxu0 0.0
    %72 = vmatprep.subr.mxu0 0.0
    %73 = vmatpush1.msra.mxu0 0.0
    %74 = vmatprep.subr.mxu0 0.0
    %75 = vmatpush1.msra.mxu0 0.0
    %76 = vmatprep.subr.mxu0 0.0
    %77 = vmatpush1.msra.mxu0 0.0
    %78 = vmatprep.subr.mxu0 0.0
    %79 = vmatpush1.msra.mxu0 0.0
    %80 = vmatprep.subr.mxu0 0.0
    %81 = vmatpush1.msra.mxu0 0.0
    %82 = vmatprep.subr.mxu0 0.0
    %83 = vmatpush1.msra.mxu0 0.0
    %84 = vmatprep.subr.mxu0 0.0
    %85 = vmatpush1.msra.mxu0 0.0
    %86 = vmatprep.subr.mxu0 0.0
    %87 = vmatpush1.msra.mxu0 0.0
    %88 = vmatprep.subr.mxu0 0.0
    %89 = vmatpush1.msra.mxu0 0.0
    %90 = vmatprep.subr.mxu0 0.0
    %91 = vmatpush1.msra.mxu0 0.0
    %92 = vmatprep.subr.mxu0 0.0
    %93 = vmatpush1.msra.mxu0 0.0
    %94 = vmatprep.subr.mxu0 0.0
    %95 = vmatpush1.msra.mxu0 0.0
    %96 = vmatprep.subr.mxu0 0.0
    %97 = vmatpush1.msra.mxu0 0.0
    %98 = vmatprep.subr.mxu0 0.0
    %99 = vmatpush1.msra.mxu0 0.0
    %100 = vmatprep.subr.mxu0 0.0
    %101 = vmatpush1.msra.mxu0 0.0
    %102 = vmatprep.mubr.f32.mxu0 0.0
    %103 = vmatmul.mubr.f32.gmra.mrb[0].mxu0 %v36
    %v104 = vpop.f32.mrb[0].mxu0
    %v105 = vadd.f32 %v32, %v104
    %v106 = vpop.f32.mrb[0].mxu0
    %107 = vdwg.mxu0
    %v108 = vmax.f32 %v105, 0.0
    %v109 = vld [vmem:[%s3] sm:$0xff]
    %v110 = vld [vmem:[%s3 + $0x8] sm:$0xff]
    %v111 = vld [vmem:[%s3 + $0x10] sm:$0xff]
    %v112 = vld [vmem:[%s3 + $0x18] sm:$0xff]
    %v113 = vld [vmem:[%s3 + $0x20] sm:$0xff]
    %v114 = vld [vmem:[%s3 + $0x28] sm:$0xff]
    %v115 = vld [vmem:[%s3 + $0x30] sm:$0xff]
    %v116 = vld [vmem:[%s3 + $0x38] sm:$0xff]
    %v117 = vld [vmem:[%s3 + $0x40] sm:$0xff]
    %v118 = vld [vmem:[%s3 + $0x48] sm:$0xff]
    %v119 = vld [vmem:[%s3 + $0x50] sm:$0xff]
    %v120 = vld [vmem:[%s3 + $0x58] sm:$0xff]
    %v121 = vld [vmem:[%s3 + $0x60] sm:$0xff]
    %v122 = vld [vmem:[%s3 + $0x68] sm:$0xff]
    %v123 = vld [vmem:[%s3 + $0x70] sm:$0xff]
    %v124 = vld [vmem:[%s3 + $0x78] sm:$0xff]
    %v125 = vld [vmem:[%s4] sm:$0x1]
    %v127 = vlaneseq
    %v128 = vshrl.u32 %v127, 7
    %v129 = vsub.s32 0, %v128
    %v130 = vrot.slane %v125, %v129
    %132 = vmatprep.subr.mxu0 0.0
    %133 = vmatpush1.msra.mxu0 %v109
    %134 = vmatprep.subr.mxu0 0.0
    %135 = vmatpush1.msra.mxu0 %v110
    %136 = vmatprep.subr.mxu0 0.0
    %137 = vmatpush1.msra.mxu0 %v111
    %138 = vmatprep.subr.mxu0 0.0
    %139 = vmatpush1.msra.mxu0 %v112
    %140 = vmatprep.subr.mxu0 0.0
    %141 = vmatpush1.msra.mxu0 %v113
    %142 = vmatprep.subr.mxu0 0.0
    %143 = vmatpush1.msra.mxu0 %v114
    %144 = vmatprep.subr.mxu0 0.0
    %145 = vmatpush1.msra.mxu0 %v115
    %146 = vmatprep.subr.mxu0 0.0
    %147 = vmatpush1.msra.mxu0 %v116
    %148 = vmatprep.subr.mxu0 0.0
    %149 = vmatpush1.msra.mxu0 %v117
    %150 = vmatprep.subr.mxu0 0.0
    %151 = vmatpush1.msra.mxu0 %v118
    %152 = vmatprep.subr.mxu0 0.0
    %153 = vmatpush1.msra.mxu0 %v119
    %154 = vmatprep.subr.mxu0 0.0
    %155 = vmatpush1.msra.mxu0 %v120
    %156 = vmatprep.subr.mxu0 0.0
    %157 = vmatpush1.msra.mxu0 %v121
    %158 = vmatprep.subr.mxu0 0.0
    %159 = vmatpush1.msra.mxu0 %v122
    %160 = vmatprep.subr.mxu0 0.0
    %161 = vmatpush1.msra.mxu0 %v123
    %162 = vmatprep.subr.mxu0 0.0
    %163 = vmatpush1.msra.mxu0 %v124
    %164 = vmatprep.subr.mxu0 0.0
    %165 = vmatpush1.msra.mxu0 0.0
    %166 = vmatprep.subr.mxu0 0.0
    %167 = vmatpush1.msra.mxu0 0.0
    %168 = vmatprep.subr.mxu0 0.0
    %169 = vmatpush1.msra.mxu0 0.0
    %170 = vmatprep.subr.mxu0 0.0
    %171 = vmatpush1.msra.mxu0 0.0
    %172 = vmatprep.subr.mxu0 0.0
    %173 = vmatpush1.msra.mxu0 0.0
    %174 = vmatprep.subr.mxu0 0.0
    %175 = vmatpush1.msra.mxu0 0.0
    %176 = vmatprep.subr.mxu0 0.0
    %177 = vmatpush1.msra.mxu0 0.0
    %178 = vmatprep.subr.mxu0 0.0
    %179 = vmatpush1.msra.mxu0 0.0
    %180 = vmatprep.subr.mxu0 0.0
    %181 = vmatpush1.msra.mxu0 0.0
    %182 = vmatprep.subr.mxu0 0.0
    %183 = vmatpush1.msra.mxu0 0.0
    %184 = vmatprep.subr.mxu0 0.0
    %185 = vmatpush1.msra.mxu0 0.0
    %186 = vmatprep.subr.mxu0 0.0
    %187 = vmatpush1.msra.mxu0 0.0
    %188 = vmatprep.subr.mxu0 0.0
    %189 = vmatpush1.msra.mxu0 0.0
    %190 = vmatprep.subr.mxu0 0.0
    %191 = vmatpush1.msra.mxu0 0.0
    %192 = vmatprep.subr.mxu0 0.0
    %193 = vmatpush1.msra.mxu0 0.0
    %194 = vmatprep.subr.mxu0 0.0
    %195 = vmatpush1.msra.mxu0 0.0
    %196 = vmatprep.mubr.f32.mxu0 0.0
    %197 = vmatmul.mubr.f32.gmra.mrb[0].mxu0 %v108
    %v198 = vpop.f32.mrb[0].mxu0
    %v199 = vadd.f32 %v130, %v198
    %v200 = vpop.f32.mrb[0].mxu0
    %201 = vdwg.mxu0
    %vm202 = vcmask 130048
    %203 = vst.msk [vmem:[#allocation2] sm:$0xff] %vm202, %v199
    // Predicated region
    $region22: #{mlp_forward.1} parent=1 // pred_check
      _
    $region23: #{mlp_forward.1} parent=1 // pred_check_branch
      %205 = sbr.rel (0) target = $region25
    $region24: #{mlp_forward.1} parent=1 // pred_region
      %s207 = ssub.s32 128, 128
      %208 = vsyncadd [#allocation3], %s207
      %s210 = sshll.u32 [#allocation2], 4
      %s211 = int_to_ptr.vmem [resolvable:$true] %s210
      %213 = dma.vmem_to_hbm [thread:$0]  %s211, 128, %s5, [#allocation3]
    $region25: #{mlp_forward.1} parent=1 // pred_fallthru
      _
    // Predicated region
    $region26: #{mlp_forward.1} parent=1 // pred_check
      _
    $region27: #{mlp_forward.1} parent=1 // pred_check_branch
      %215 = sbr.rel (0) target = $region29
    $region28: #{mlp_forward.1} parent=1 // pred_region
      %216 = dma.done [#allocation3], 128
    $region29: #{mlp_forward.1} parent=1 // pred_fallthru
      _
    %217 = vsyncpa [#allocation3], 1

</llo_original>
